<compile_context>
chip_gen: v6e
topology: v6e:2x2x1
jax: 0.10.0
libtpu: 0.0.40
codegen_flags: <defaults>
</compile_context>

<pallas_src>
import jax
import jax.numpy as jnp
from jax.experimental import pallas as pl
from jax.experimental.pallas import tpu as pltpu


def _round_up(n: int, m: int) -> int:
    return -(-n // m) * m


def _pad2(a, r, c):
    pr, pc = r - a.shape[0], c - a.shape[1]
    if pr == 0 and pc == 0:
        return a
    return jnp.pad(a, ((0, pr), (0, pc)))


# ----------------------------------------------------------------------------
# Fused kernel:  y_raw = x @ v_w.T   +   per-(i,j) partial sums of ||v_w||_F^2
# ----------------------------------------------------------------------------
def _wn_matmul_kernel(x_ref, vw_ref, o_ref, ssq_ref, acc_ref, ssq_acc):
    i = pl.program_id(0)
    k = pl.program_id(2)
    nk = pl.num_programs(2)

    @pl.when(k == 0)
    def _():
        acc_ref[...] = jnp.zeros_like(acc_ref)

    # Un-scaled matmul: x[tb, tk] . vw[tn, tk]^T (contract the In axis). A·Bᵀ is the native
    # flash-attention-style MXU form, native-dtype operands, f32 accumulation.
    acc_ref[...] += jax.lax.dot_general(
        x_ref[...], vw_ref[...],
        dimension_numbers=(((1,), (1,)), ((), ())),
        preferred_element_type=jnp.float32)

    # Fused Frobenius sum-of-squares of the weight.  Each (j, k) weight tile is counted
    # exactly once: only during the i == 0 sweep (the weight is read from HBM only once, so
    # the norm rides along with the matmul's weight stream instead of a second HBM pass).
    @pl.when(jnp.logical_and(i == 0, k == 0))
    def _():
        ssq_acc[0] = jnp.float32(0.0)

    @pl.when(i == 0)
    def _():
        vw = vw_ref[...].astype(jnp.float32)
        ssq_acc[0] += jnp.sum(vw * vw)   # reduce hidden under MXU work; i==0 sweep only

    @pl.when(k == nk - 1)
    def _():
        o_ref[...] = acc_ref[...].astype(o_ref.dtype)
        # One (1,1) SMEM block per (i, j): row i==0 holds the per-j partials (summed over k),
        # rows i>0 are written as zeros so every output block is defined exactly once and
        # there are no revisited / racy blocks under megacore sharding.
        ssq_ref[0, 0] = jnp.where(i == 0, ssq_acc[0], jnp.float32(0.0))


def weight_norm_linear(x, g_w, v_w, g_b, v_b, *,
                       tb_max=256, tn_max=512, tk_max=1024,
                       operand_dtype=None):
    """WeightNorm(nn.Linear).forward(x).

    x: [B, In]; g_w scalar, v_w: [Out, In]; g_b scalar, v_b: [Out]. Returns [B, Out].
    `operand_dtype=jnp.bfloat16` optionally casts MXU operands (f32 accumulation kept).
    """
    B, In = x.shape
    Out, In2 = v_w.shape
    assert In == In2 and v_b.shape == (Out,)
    out_dtype = x.dtype

    if operand_dtype is not None:
        x = x.astype(operand_dtype)
        v_w = v_w.astype(operand_dtype)

    # Tile sizes: sublane dim rounded to dtype packing (8 f32 / 16 bf16 / 32 int8-fp8),
    # lane dims multiples of 128 (lane-dense output). Defaults (256, 512, 1024) use ~8 MiB
    # VMEM worst case (double-buffered inputs/output + f32 accumulator) — safe on v7x's
    # 64 MiB VMEM and large enough to amortize the ~0.35 us/grid-step overhead on v5e/v6e.
    itemsize = jnp.dtype(x.dtype).itemsize
    sub = 8 * max(1, 4 // itemsize)
    tb = min(tb_max, _round_up(B, sub))
    tn = min(tn_max, _round_up(Out, 128))
    tk = min(tk_max, _round_up(In, 128))
    B_pad, Out_pad, In_pad = _round_up(B, tb), _round_up(Out, tn), _round_up(In, tk)

    x_p = _pad2(x, B_pad, In_pad)
    vw_p = _pad2(v_w, Out_pad, In_pad)

    gi, gj, gk = B_pad // tb, Out_pad // tn, In_pad // tk

    bytes_accessed = (x_p.size * x_p.dtype.itemsize
                      + vw_p.size * vw_p.dtype.itemsize
                      + B_pad * Out_pad * jnp.dtype(out_dtype).itemsize
                      + gi * gj * 4)

    y_raw, ssq = pl.pallas_call(
        _wn_matmul_kernel,
        out_shape=(jax.ShapeDtypeStruct((B_pad, Out_pad), out_dtype),
                   jax.ShapeDtypeStruct((gi, gj), jnp.float32)),
        grid_spec=pltpu.PrefetchScalarGridSpec(
            num_scalar_prefetch=0,
            grid=(gi, gj, gk),
            in_specs=[
                pl.BlockSpec((tb, tk), lambda i, j, k: (i, k)),   # x
                pl.BlockSpec((tn, tk), lambda i, j, k: (j, k)),   # v_w
            ],
            out_specs=(
                pl.BlockSpec((tb, tn), lambda i, j, k: (i, j)),   # y_raw (lane-dense)
                pl.BlockSpec((1, 1), lambda i, j, k: (i, j),
                             memory_space=pltpu.MemorySpace.SMEM),  # ||v_w||^2 partials
            ),
            scratch_shapes=[pltpu.VMEM((tb, tn), jnp.float32),    # f32 accumulator
                            pltpu.SMEM((1,), jnp.float32)],       # per-(i,j) sumsq over k
        ),
        compiler_params=pltpu.CompilerParams(
            # B and Out tiles independent (megacore split); In reduction is the last axis.
            dimension_semantics=("parallel", "parallel", "arbitrary"),
            vmem_limit_bytes=48 * 1024 * 1024,   # <= v7x physical 64 MiB; plenty on v5e/v6e
        ),
        cost_estimate=pl.CostEstimate(
            flops=2 * B_pad * In_pad * Out_pad,
            transcendentals=0,
            bytes_accessed=bytes_accessed),
    )(x_p, vw_p)

    # Plain-XLA epilogue over the small [B, Out] result (and the tiny bias vector):
    # whole-tensor norms are only complete once every weight tile has been seen, so the
    # scale cannot be applied per-tile inside the matmul pass anyway.
    sumsq_w = jnp.sum(ssq)                                            # rows i>0 are zeros
    sumsq_b = jnp.sum(jnp.square(v_b.astype(jnp.float32)))
    # NOTE: like PyTorch, no guard against ||v|| == 0.
    scale_w = g_w.astype(jnp.float32).reshape(()) * jax.lax.rsqrt(sumsq_w)
    scale_b = g_b.astype(jnp.float32).reshape(()) * jax.lax.rsqrt(sumsq_b)
    y = (y_raw[:B, :Out].astype(jnp.float32) * scale_w
         + v_b.astype(jnp.float32) * scale_b)
    return y.astype(out_dtype)


# ----------------------------------------------------------------------------
# Parameter setup (WeightNorm._reset) and a pure-JAX reference of forward().
# ----------------------------------------------------------------------------
def weight_norm_reset(w):
    """g = ||w||_F, v = w / g  (replicates WeightNorm._reset; pure parameter glue)."""
    g = jnp.sqrt(jnp.sum(jnp.square(w.astype(jnp.float32)))).astype(w.dtype)
    return g, w / g


def reference_forward(x, g_w, v_w, g_b, v_b):
    w = v_w * (g_w / jnp.sqrt(jnp.sum(jnp.square(v_w))))
    b = v_b * (g_b / jnp.sqrt(jnp.sum(jnp.square(v_b))))
    return x @ w.T + b


if __name__ == "__main__":
    key = jax.random.PRNGKey(0)
    k_x, k_w, k_b = jax.random.split(key, 3)

    # Small shapes consistent with WeightNorm(nn.Linear(32, 16)).
    B, In, Out = 8, 32, 16
    w0 = jax.random.normal(k_w, (Out, In), jnp.float32) * 0.1
    b0 = jax.random.normal(k_b, (Out,), jnp.float32) * 0.1
    x = jax.random.normal(k_x, (B, In), jnp.float32)

    g_w, v_w = weight_norm_reset(w0)
    g_b, v_b = weight_norm_reset(b0)

    y = jax.block_until_ready(weight_norm_linear(x, g_w, v_w, g_b, v_b))
    y_ref = reference_forward(x, g_w, v_w, g_b, v_b)
    assert y.shape == (B, Out)
    assert jnp.allclose(y, y_ref, atol=2e-2, rtol=2e-2), "small-shape mismatch vs reference"

    # Second check: larger shape at default tiles (single fat block, full-extent tiles).
    B2, In2, Out2 = 128, 640, 384
    k_x2, k_w2, k_b2 = jax.random.split(jax.random.PRNGKey(1), 3)
    w2 = jax.random.normal(k_w2, (Out2, In2), jnp.float32) * 0.05
    b2 = jax.random.normal(k_b2, (Out2,), jnp.float32) * 0.05
    x2 = jax.random.normal(k_x2, (B2, In2), jnp.float32)
    g_w2, v_w2 = weight_norm_reset(w2)
    g_b2, v_b2 = weight_norm_reset(b2)
    y2 = jax.block_until_ready(weight_norm_linear(x2, g_w2, v_w2, g_b2, v_b2))
    y2_ref = reference_forward(x2, g_w2, v_w2, g_b2, v_b2)
    assert y2.shape == (B2, Out2)
    assert jnp.allclose(y2, y2_ref, atol=2e-2, rtol=2e-2), "default-tile mismatch vs reference"

    # Third check: same shape with small tile overrides to force a multi-step (2,3,3) grid —
    # exercises the k-axis f32 accumulator, zero-padding of In, the fused per-(i,j) sumsq
    # partials (i==0 real values, i>0 zero rows), and the XLA scale/bias epilogue.
    y3 = jax.block_until_ready(
        weight_norm_linear(x2, g_w2, v_w2, g_b2, v_b2, tb_max=64, tn_max=128, tk_max=256))
    assert y3.shape == (B2, Out2)
    assert jnp.allclose(y3, y2_ref, atol=2e-2, rtol=2e-2), "tiled-grid mismatch vs reference"

    print("KERNEL_OK")
</pallas_src>

<mosaic_0001>
module attributes {stable_mosaic.version = 11 : i64} {
  func.func @_wn_matmul_kernel(%arg0: i32, %arg1: i32, %arg2: i32, %arg3: memref<8x128xf32, #tpu.memory_space<vmem>>, %arg4: memref<128x128xf32, #tpu.memory_space<vmem>>, %arg5: memref<8x128xf32, #tpu.memory_space<vmem>>, %arg6: memref<1x1xf32, #tpu.memory_space<smem>>, %arg7: memref<8x128xf32, #tpu.memory_space<vmem>>, %arg8: memref<1xf32, #tpu.memory_space<smem>>) attributes {dimension_semantics = [#tpu.dimension_semantics<parallel>, #tpu.dimension_semantics<parallel>, #tpu.dimension_semantics<arbitrary>], iteration_bounds = array<i64: 1, 1, 1>, scalar_prefetch = 0 : i64, scratch_operands = 2 : i64, tpu.core_type = #tpu.core_type<tc>, window_params = [{transform_indices = @transform_0, window_bounds = array<i64: 8, 128>}, {transform_indices = @transform_1, window_bounds = array<i64: 128, 128>}, {transform_indices = @transform_2, window_bounds = array<i64: 8, 128>}, {transform_indices = @transform_3, window_bounds = array<i64: 1, 1>}]} {
    %c0_i32 = arith.constant 0 : i32
    %0 = arith.cmpi eq, %arg2, %c0_i32 : i32
    %1 = arith.extui %0 : i1 to i32
    %c0_i32_0 = arith.constant 0 : i32
    %2 = arith.cmpi ne, %1, %c0_i32_0 : i32
    scf.if %2 {
      %cst_15 = arith.constant 0.000000e+00 : f32
      %20 = vector.broadcast %cst_15 : f32 to vector<8x128xf32>
      %c0_16 = arith.constant 0 : index
      %c0_17 = arith.constant 0 : index
      %21 = vector.load %arg7[%c0_16, %c0_17] : memref<8x128xf32, #tpu.memory_space<vmem>>, vector<8x128xf32>
      tpu.vector_store %arg7[%c0_16, %c0_17], %20 {strides = array<i32>} : memref<8x128xf32, #tpu.memory_space<vmem>>, vector<8x128xf32>,
    } else {
    }
    %c0 = arith.constant 0 : index
    %c0_1 = arith.constant 0 : index
    %3 = vector.load %arg7[%c0, %c0_1] : memref<8x128xf32, #tpu.memory_space<vmem>>, vector<8x128xf32>
    %c0_2 = arith.constant 0 : index
    %c0_3 = arith.constant 0 : index
    %4 = vector.load %arg3[%c0_2, %c0_3] : memref<8x128xf32, #tpu.memory_space<vmem>>, vector<8x128xf32>
    %c0_4 = arith.constant 0 : index
    %c0_5 = arith.constant 0 : index
    %5 = vector.load %arg4[%c0_4, %c0_5] : memref<128x128xf32, #tpu.memory_space<vmem>>, vector<128x128xf32>
    %cst = arith.constant dense<0.000000e+00> : vector<8x128xf32>
    %6 = tpu.matmul %4, %5, %cst {dimension_numbers = #tpu.dot_dimension_numbers<[1], [1], [0], [0], [0, 0, 1, 0], [], []>} : vector<8x128xf32>, vector<128x128xf32>, vector<8x128xf32> -> vector<8x128xf32>
    %7 = arith.addf %3, %6 : vector<8x128xf32>
    %c0_6 = arith.constant 0 : index
    %c0_7 = arith.constant 0 : index
    %8 = vector.load %arg7[%c0_6, %c0_7] : memref<8x128xf32, #tpu.memory_space<vmem>>, vector<8x128xf32>
    tpu.vector_store %arg7[%c0_6, %c0_7], %7 {strides = array<i32>} : memref<8x128xf32, #tpu.memory_space<vmem>>, vector<8x128xf32>,
    %c0_i32_8 = arith.constant 0 : i32
    %9 = arith.cmpi eq, %arg0, %c0_i32_8 : i32
    %c0_i32_9 = arith.constant 0 : i32
    %10 = arith.cmpi eq, %arg2, %c0_i32_9 : i32
    %11 = arith.andi %9, %10 : i1
    %12 = arith.extui %11 : i1 to i32
    %c0_i32_10 = arith.constant 0 : i32
    %13 = arith.cmpi ne, %12, %c0_i32_10 : i32
    scf.if %13 {
      %cst_15 = arith.constant 0.000000e+00 : f32
      %c0_16 = arith.constant 0 : index
      %20 = memref.load %arg8[%c0_16] : memref<1xf32, #tpu.memory_space<smem>>
      memref.store %cst_15, %arg8[%c0_16] : memref<1xf32, #tpu.memory_space<smem>>
    } else {
    }
    %c0_i32_11 = arith.constant 0 : i32
    %14 = arith.cmpi eq, %arg0, %c0_i32_11 : i32
    %15 = arith.extui %14 : i1 to i32
    %c0_i32_12 = arith.constant 0 : i32
    %16 = arith.cmpi ne, %15, %c0_i32_12 : i32
    scf.if %16 {
      %c0_15 = arith.constant 0 : index
      %c0_16 = arith.constant 0 : index
      %20 = vector.load %arg4[%c0_15, %c0_16] : memref<128x128xf32, #tpu.memory_space<vmem>>, vector<128x128xf32>
      %c0_17 = arith.constant 0 : index
      %21 = memref.load %arg8[%c0_17] : memref<1xf32, #tpu.memory_space<smem>>
      %22 = arith.mulf %20, %20 : vector<128x128xf32>
      %23 = vector.shape_cast %22 : vector<128x128xf32> to vector<1x128x128xf32>
      %cst_18 = arith.constant dense<0.000000e+00> : vector<1xf32>
      %24 = vector.multi_reduction <add>, %23, %cst_18 [1, 2] : vector<1x128x128xf32> to vector<1xf32>
      %25 = vector.shape_cast %24 : vector<1xf32> to vector<1x1x1xf32>
      %26 = vector.extract %25[0, 0, 0] : f32 from vector<1x1x1xf32>
      %27 = arith.addf %21, %26 : f32
      %c0_19 = arith.constant 0 : index
      %28 = memref.load %arg8[%c0_19] : memref<1xf32, #tpu.memory_space<smem>>
      memref.store %27, %arg8[%c0_19] : memref<1xf32, #tpu.memory_space<smem>>
    } else {
    }
    %c0_i32_13 = arith.constant 0 : i32
    %17 = arith.cmpi eq, %arg2, %c0_i32_13 : i32
    %18 = arith.extui %17 : i1 to i32
    %c0_i32_14 = arith.constant 0 : i32
    %19 = arith.cmpi ne, %18, %c0_i32_14 : i32
    scf.if %19 {
      %c0_15 = arith.constant 0 : index
      %c0_16 = arith.constant 0 : index
      %20 = vector.load %arg7[%c0_15, %c0_16] : memref<8x128xf32, #tpu.memory_space<vmem>>, vector<8x128xf32>
      %c0_17 = arith.constant 0 : index
      %c0_18 = arith.constant 0 : index
      %21 = vector.load %arg5[%c0_17, %c0_18] : memref<8x128xf32, #tpu.memory_space<vmem>>, vector<8x128xf32>
      tpu.vector_store %arg5[%c0_17, %c0_18], %20 {strides = array<i32>} : memref<8x128xf32, #tpu.memory_space<vmem>>, vector<8x128xf32>,
      %c0_i32_19 = arith.constant 0 : i32
      %22 = arith.cmpi eq, %arg0, %c0_i32_19 : i32
      %c0_20 = arith.constant 0 : index
      %23 = memref.load %arg8[%c0_20] : memref<1xf32, #tpu.memory_space<smem>>
      %cst_21 = arith.constant 0.000000e+00 : f32
      %24 = arith.select %22, %23, %cst_21 : f32
      %c0_22 = arith.constant 0 : index
      %c0_23 = arith.constant 0 : index
      %25 = memref.load %arg6[%c0_22, %c0_23] : memref<1x1xf32, #tpu.memory_space<smem>>
      memref.store %24, %arg6[%c0_22, %c0_23] : memref<1x1xf32, #tpu.memory_space<smem>>
    } else {
    }
    return
  }
  func.func @transform_0(%arg0: i32, %arg1: i32, %arg2: i32) -> (i32, i32) {
    %c0_i32 = arith.constant 0 : i32
    return %arg0, %arg2 : i32, i32
  }
  func.func @transform_1(%arg0: i32, %arg1: i32, %arg2: i32) -> (i32, i32) {
    %c0_i32 = arith.constant 0 : i32
    return %arg1, %arg2 : i32, i32
  }
  func.func @transform_2(%arg0: i32, %arg1: i32, %arg2: i32) -> (i32, i32) {
    %c0_i32 = arith.constant 0 : i32
    return %arg0, %arg1 : i32, i32
  }
  func.func @transform_3(%arg0: i32, %arg1: i32, %arg2: i32) -> (i32, i32) {
    %c0_i32 = arith.constant 0 : i32
    return %arg0, %arg1 : i32, i32
  }
}

</mosaic_0001>

<llo_original>
// kernel: tpu_custom_call.1
$region0: #{tpu_custom_call.1}
  #allocation0 [shape = 'u32[]', space=smem, size = 0x4, offset = 0x4, fixed_abs, tag = 'smem constant byte address 0x4 - core index']
  #allocation1 [shape = 'u32[144,128]{1,0:T(1,128)}', space=vmem, size = 0x12000, scoped, tag = 'internal scratch']
  #allocation2 [shape = 'f32[8,128]{1,0:T(8,128)}', space=vmem, size = 0x1000, scoped, tag = 'scratch operand']
  #allocation3 [shape = 'f32[1]{0:T(128)}', space=smem, size = 0x200, scoped, tag = 'scratch operand']
  %s0 = inlined_call_operand.hbm [shape: f32[8,128], index: 0, kind: input, shape index: {}]
  %s1 = inlined_call_operand.hbm [shape: f32[128,128], index: 1, kind: input, shape index: {}]
  %s2 = inlined_call_operand.hbm [shape: f32[8,128], index: 2, kind: output, shape index: {0}]
  %s3 = inlined_call_operand.hbm [shape: f32[1,1], index: 3, kind: output, shape index: {1}]
  %4 = xla_tuple %s2, %s3
  %s5 = sld [smem:[#allocation0]]
  $region50: #{tpu_custom_call.1} parent=0
    _
  %s7 = ssub.s32 1, %s5
  %s8 = scalar_select 0, %s7, %s5
  $region1: #{tpu_custom_call.1} parent=0
    #allocation4 [shape = 'u8[4096]{0}', space=vmem, size = 0x1000, scoped, tag = 'input window, operand 0, single buffered']
    #allocation5 [shape = 's32[1]{0}', space=sflag, size = 0x4, scoped, tag = 'scoped memory for tpu_custom_call.1']
    #allocation6 [shape = 's32[1]{0}', space=sflag, size = 0x4, scoped, tag = 'scoped memory for tpu_custom_call.1']
    #allocation7 [shape = 's32[1]{0}', space=sflag, size = 0x4, scoped, tag = 'scoped memory for tpu_custom_call.1']
    #allocation8 [shape = 'u8[65536]{0}', space=vmem, size = 0x10000, scoped, tag = 'input window, operand 1, single buffered']
    #allocation9 [shape = 's32[1]{0}', space=sflag, size = 0x4, scoped, tag = 'scoped memory for tpu_custom_call.1']
    #allocation10 [shape = 'u8[4096]{0}', space=vmem, size = 0x1000, scoped, tag = 'output window, operand 0, single buffered']
    #allocation11 [shape = 'u8[512]{0}', space=smem, size = 0x200, scoped, tag = 'output window, operand 1, single buffered']
    %9 = vsyncpa [#allocation5], 0
    %10 = vsyncpa [#allocation9], 0
    %11 = vsyncpa [#allocation6], 0
    %12 = vsyncpa [#allocation7], 0
    // Predicated region
    $region2: #{tpu_custom_call.1} parent=1 // pred_check
      _
    $region3: #{tpu_custom_call.1} parent=1 // pred_check_branch
      %14 = sbr.rel (0) target = $region5
    $region4: #{tpu_custom_call.1} parent=1 // pred_region
      %s16 = ssub.s32 128, 128
      %17 = vsyncadd [#allocation5], %s16
      %s19 = sshll.u32 [#allocation4], 4
      %s20 = int_to_ptr.vmem [resolvable:$true] %s19
      %22 = dma.hbm_to_vmem [thread:$0]  %s0, 128, %s20, [#allocation5]
    $region5: #{tpu_custom_call.1} parent=1 // pred_fallthru
      _
    // Predicated region
    $region6: #{tpu_custom_call.1} parent=1 // pred_check
      _
    $region7: #{tpu_custom_call.1} parent=1 // pred_check_branch
      %24 = sbr.rel (0) target = $region9
    $region8: #{tpu_custom_call.1} parent=1 // pred_region
      %s26 = ssub.s32 2048, 2048
      %27 = vsyncadd [#allocation9], %s26
      %s28 = sshll.u32 [#allocation8], 4
      %s29 = int_to_ptr.vmem [resolvable:$true] %s28
      %34 = dma.hbm_to_vmem [thread:$0]  %s1, 2048, %s29, [#allocation9], 128, 128, 8
    $region9: #{tpu_custom_call.1} parent=1 // pred_fallthru
      _
    // Predicated region
    $region10: #{tpu_custom_call.1} parent=1 // pred_check
      _
    $region11: #{tpu_custom_call.1} parent=1 // pred_check_branch
      %36 = sbr.rel (0) target = $region13
    $region12: #{tpu_custom_call.1} parent=1 // pred_region
      %37 = dma.done [#allocation5], 128
    $region13: #{tpu_custom_call.1} parent=1 // pred_fallthru
      _
    // Predicated region
    $region14: #{tpu_custom_call.1} parent=1 // pred_check
      _
    $region15: #{tpu_custom_call.1} parent=1 // pred_check_branch
      %39 = sbr.rel (0) target = $region17
    $region16: #{tpu_custom_call.1} parent=1 // pred_region
      %40 = dma.done [#allocation9], 2048
    $region17: #{tpu_custom_call.1} parent=1 // pred_fallthru
      _
    %p41 = scmp.eq.s32.totalorder 0, 0
    // Predicated region
    $region18: #{tpu_custom_call.1} parent=1 // pred_check
      %p42 = pneg %p41
    $region19: #{tpu_custom_call.1} parent=1 // pred_check_branch
      %44 = sbr.rel (%p42) target = $region21
    $region20: #{tpu_custom_call.1} parent=1 // pred_region
      %45 = vst [vmem:[#allocation2] sm:$0xff] 0.0
    $region21: #{tpu_custom_call.1} parent=1 // pred_fallthru
      _
    %v46 = vld [vmem:[#allocation2] sm:$0xff]
    %v47 = vld [vmem:[#allocation4] sm:$0xff]
    %v48 = vld [vmem:[#allocation8] sm:$0xff]
    %v49 = vld [vmem:[#allocation8 + $0x8] sm:$0xff]
    %v50 = vld [vmem:[#allocation8 + $0x10] sm:$0xff]
    %v51 = vld [vmem:[#allocation8 + $0x18] sm:$0xff]
    %v52 = vld [vmem:[#allocation8 + $0x20] sm:$0xff]
    %v53 = vld [vmem:[#allocation8 + $0x28] sm:$0xff]
    %v54 = vld [vmem:[#allocation8 + $0x30] sm:$0xff]
    %v55 = vld [vmem:[#allocation8 + $0x38] sm:$0xff]
    %v56 = vld [vmem:[#allocation8 + $0x40] sm:$0xff]
    %v57 = vld [vmem:[#allocation8 + $0x48] sm:$0xff]
    %v58 = vld [vmem:[#allocation8 + $0x50] sm:$0xff]
    %v59 = vld [vmem:[#allocation8 + $0x58] sm:$0xff]
    %v60 = vld [vmem:[#allocation8 + $0x60] sm:$0xff]
    %v61 = vld [vmem:[#allocation8 + $0x68] sm:$0xff]
    %v62 = vld [vmem:[#allocation8 + $0x70] sm:$0xff]
    %v63 = vld [vmem:[#allocation8 + $0x78] sm:$0xff]
    %64 = vmatprep.subr.mxu0 0.0
    %65 = vmatpush1.xpose.msra.mxu0 %v63
    %66 = vmatprep.subr.mxu0 0.0
    %67 = vmatpush1.xpose.msra.mxu0 %v62
    %68 = vmatprep.subr.mxu0 0.0
    %69 = vmatpush1.xpose.msra.mxu0 %v61
    %70 = vmatprep.subr.mxu0 0.0
    %71 = vmatpush1.xpose.msra.mxu0 %v60
    %72 = vmatprep.subr.mxu0 0.0
    %73 = vmatpush1.xpose.msra.mxu0 %v59
    %74 = vmatprep.subr.mxu0 0.0
    %75 = vmatpush1.xpose.msra.mxu0 %v58
    %76 = vmatprep.subr.mxu0 0.0
    %77 = vmatpush1.xpose.msra.mxu0 %v57
    %78 = vmatprep.subr.mxu0 0.0
    %79 = vmatpush1.xpose.msra.mxu0 %v56
    %80 = vmatprep.subr.mxu0 0.0
    %81 = vmatpush1.xpose.msra.mxu0 %v55
    %82 = vmatprep.subr.mxu0 0.0
    %83 = vmatpush1.xpose.msra.mxu0 %v54
    %84 = vmatprep.subr.mxu0 0.0
    %85 = vmatpush1.xpose.msra.mxu0 %v53
    %86 = vmatprep.subr.mxu0 0.0
    %87 = vmatpush1.xpose.msra.mxu0 %v52
    %88 = vmatprep.subr.mxu0 0.0
    %89 = vmatpush1.xpose.msra.mxu0 %v51
    %90 = vmatprep.subr.mxu0 0.0
    %91 = vmatpush1.xpose.msra.mxu0 %v50
    %92 = vmatprep.subr.mxu0 0.0
    %93 = vmatpush1.xpose.msra.mxu0 %v49
    %94 = vmatprep.subr.mxu0 0.0
    %95 = vmatpush1.xpose.msra.mxu0 %v48
    %96 = vmatprep.subr.mxu0 0.0
    %97 = vmatpush2.xpose.msra.mxu0 0.0
    %98 = vmatprep.subr.mxu0 0.0
    %99 = vmatpush2.xpose.msra.mxu0 0.0
    %100 = vmatprep.subr.mxu0 0.0
    %101 = vmatpush2.xpose.msra.mxu0 0.0
    %102 = vmatprep.subr.mxu0 0.0
    %103 = vmatpush2.xpose.msra.mxu0 0.0
    %104 = vmatprep.subr.mxu0 0.0
    %105 = vmatpush2.xpose.msra.mxu0 0.0
    %106 = vmatprep.subr.mxu0 0.0
    %107 = vmatpush2.xpose.msra.mxu0 0.0
    %108 = vmatprep.subr.mxu0 0.0
    %109 = vmatpush2.xpose.msra.mxu0 0.0
    %110 = vmatprep.subr.mxu0 0.0
    %111 = vmatpush2.xpose.msra.mxu0 0.0
    %112 = vmatprep.subr.mxu0 0.0
    %113 = vmatpush2.xpose.msra.mxu0 0.0
    %114 = vmatprep.subr.mxu0 0.0
    %115 = vmatpush2.xpose.msra.mxu0 0.0
    %116 = vmatprep.subr.mxu0 0.0
    %117 = vmatpush2.xpose.msra.mxu0 0.0
    %118 = vmatprep.subr.mxu0 0.0
    %119 = vmatpush2.xpose.msra.mxu0 0.0
    %120 = vmatprep.subr.mxu0 0.0
    %121 = vmatpush2.xpose.msra.mxu0 0.0
    %122 = vmatprep.subr.mxu0 0.0
    %123 = vmatpush2.xpose.msra.mxu0 0.0
    %124 = vmatprep.subr.mxu0 0.0
    %125 = vmatpush2.xpose.msra.mxu0 0.0
    %126 = vmatprep.subr.mxu0 0.0
    %127 = vmatpush2.xpose.msra.mxu0 0.0
    %128 = vmatprep.mubr.f32.mxu0 0.0
    %129 = vmatmul.mubr.f32.gmra.mxu0 %v47
    %v130 = vpop.f32.mrf.mxu0
    %v131 = vadd.f32 0.0, %v130
    %v132 = vpop.f32.mrf.mxu0
    %133 = vdwg.mxu0
    %v134 = vadd.f32 %v46, %v131
    %135 = vst [vmem:[#allocation2] sm:$0xff] %v134
    %p136 = scmp.eq.s32.totalorder 0, 0
    %p137 = pnand %p136, %p41
    %p138 = pneg %p137
    // Predicated region
    $region22: #{tpu_custom_call.1} parent=1 // pred_check
      _
    $region23: #{tpu_custom_call.1} parent=1 // pred_check_branch
      %140 = sbr.rel (%p137) target = $region25
    $region24: #{tpu_custom_call.1} parent=1 // pred_region
      %s141 = scalar_lea.smem [#allocation3], 0
      %142 = sst [smem:[%s141]] 0.0
    $region25: #{tpu_custom_call.1} parent=1 // pred_fallthru
      _
    // Predicated region
    $region26: #{tpu_custom_call.1} parent=1 // pred_check
      %p143 = pneg %p136
    $region27: #{tpu_custom_call.1} parent=1 // pred_check_branch
      %145 = sbr.rel (%p143) target = $region29
    $region28: #{tpu_custom_call.1} parent=1 // pred_region
      %v146 = vld [vmem:[#allocation8] sm:$0xff]
      %v147 = vld [vmem:[#allocation8 + $0x8] sm:$0xff]
      %v148 = vld [vmem:[#allocation8 + $0x10] sm:$0xff]
      %v149 = vld [vmem:[#allocation8 + $0x18] sm:$0xff]
      %v150 = vld [vmem:[#allocation8 + $0x20] sm:$0xff]
      %v151 = vld [vmem:[#allocation8 + $0x28] sm:$0xff]
      %v152 = vld [vmem:[#allocation8 + $0x30] sm:$0xff]
      %v153 = vld [vmem:[#allocation8 + $0x38] sm:$0xff]
      %v154 = vld [vmem:[#allocation8 + $0x40] sm:$0xff]
      %v155 = vld [vmem:[#allocation8 + $0x48] sm:$0xff]
      %v156 = vld [vmem:[#allocation8 + $0x50] sm:$0xff]
      %v157 = vld [vmem:[#allocation8 + $0x58] sm:$0xff]
      %v158 = vld [vmem:[#allocation8 + $0x60] sm:$0xff]
      %v159 = vld [vmem:[#allocation8 + $0x68] sm:$0xff]
      %v160 = vld [vmem:[#allocation8 + $0x70] sm:$0xff]
      %v161 = vld [vmem:[#allocation8 + $0x78] sm:$0xff]
      %s162 = sld [smem:[#allocation3]]
      %v163 = vmul.f32 %v146, %v146
      %v164 = vmul.f32 %v147, %v147
      %v165 = vmul.f32 %v148, %v148
      %v166 = vmul.f32 %v149, %v149
      %v167 = vmul.f32 %v150, %v150
      %v168 = vmul.f32 %v151, %v151
      %v169 = vmul.f32 %v152, %v152
      %v170 = vmul.f32 %v153, %v153
      %v171 = vmul.f32 %v154, %v154
      %v172 = vmul.f32 %v155, %v155
      %v173 = vmul.f32 %v156, %v156
      %v174 = vmul.f32 %v157, %v157
      %v175 = vmul.f32 %v158, %v158
      %v176 = vmul.f32 %v159, %v159
      %v177 = vmul.f32 %v160, %v160
      %v178 = vmul.f32 %v161, %v161
      %v179 = vadd.f32 %v163, %v164
      %v180 = vadd.f32 %v179, %v165
      %v181 = vadd.f32 %v180, %v166
      %v182 = vadd.f32 %v181, %v167
      %v183 = vadd.f32 %v182, %v168
      %v184 = vadd.f32 %v183, %v169
      %v185 = vadd.f32 %v184, %v170
      %v186 = vadd.f32 %v185, %v171
      %v187 = vadd.f32 %v186, %v172
      %v188 = vadd.f32 %v187, %v173
      %v189 = vadd.f32 %v188, %v174
      %v190 = vadd.f32 %v189, %v175
      %v191 = vadd.f32 %v190, %v176
      %v192 = vadd.f32 %v191, %v177
      %v193 = vadd.f32 %v192, %v178
      %194 = vadd.xlane.f32.xlu0 %v193
      %v195 = vpop.xlane.xlu0 %194
      %v196 = vrot.slane %v195, 4
      %v197 = vadd.f32 %v195, %v196
      %v198 = vrot.slane %v197, 2
      %v199 = vadd.f32 %v197, %v198
      %v200 = vrot.slane %v199, 1
      %v201 = vadd.f32 %v199, %v200
      %s202 = vtos %v201
      %s203 = sadd.f32 %s162, %s202
      %s204 = scalar_lea.smem [#allocation3], 0
      %205 = sst [smem:[%s204]] %s203
    $region29: #{tpu_custom_call.1} parent=1 // pred_fallthru
      _
    // Predicated region
    $region30: #{tpu_custom_call.1} parent=1 // pred_check
      %p206 = pneg %p41
    $region31: #{tpu_custom_call.1} parent=1 // pred_check_branch
      %208 = sbr.rel (%p206) target = $region33
    $region32: #{tpu_custom_call.1} parent=1 // pred_region
      %v209 = vld [vmem:[#allocation2] sm:$0xff]
      %210 = vst [vmem:[#allocation10] sm:$0xff] %v209
      %s211 = sld [smem:[#allocation3]]
      %s212 = scalar_select %p136, %s211, 0.0
      %s213 = scalar_lea.smem [#allocation11], 0
      %214 = sst [smem:[%s213]] %s212
    $region33: #{tpu_custom_call.1} parent=1 // pred_fallthru
      _
    // Predicated region
    $region34: #{tpu_custom_call.1} parent=1 // pred_check
      _
    $region35: #{tpu_custom_call.1} parent=1 // pred_check_branch
      %216 = sbr.rel (0) target = $region37
    $region36: #{tpu_custom_call.1} parent=1 // pred_region
      %s218 = ssub.s32 128, 128
      %219 = vsyncadd [#allocation6], %s218
      %s221 = sshll.u32 [#allocation10], 4
      %s222 = int_to_ptr.vmem [resolvable:$true] %s221
      %224 = dma.vmem_to_hbm [thread:$0]  %s222, 128, %s2, [#allocation6]
    $region37: #{tpu_custom_call.1} parent=1 // pred_fallthru
      _
    // Predicated region
    $region38: #{tpu_custom_call.1} parent=1 // pred_check
      _
    $region39: #{tpu_custom_call.1} parent=1 // pred_check_branch
      %226 = sbr.rel (0) target = $region41
    $region40: #{tpu_custom_call.1} parent=1 // pred_region
      %s228 = ssub.s32 16, 16
      %229 = vsyncadd [#allocation7], %s228
      %232 = dma.smem_to_hbm [#allocation11], 16, %s3, [#allocation7]
    $region41: #{tpu_custom_call.1} parent=1 // pred_fallthru
      _
    // Predicated region
    $region42: #{tpu_custom_call.1} parent=1 // pred_check
      _
    $region43: #{tpu_custom_call.1} parent=1 // pred_check_branch
      %234 = sbr.rel (0) target = $region45
    $region44: #{tpu_custom_call.1} parent=1 // pred_region
      %235 = dma.done [#allocation6], 128
    $region45: #{tpu_custom_call.1} parent=1 // pred_fallthru
      _
    // Predicated region
    $region46: #{tpu_custom_call.1} parent=1 // pred_check
      _
    $region47: #{tpu_custom_call.1} parent=1 // pred_check_branch
      %237 = sbr.rel (0) target = $region49
    $region48: #{tpu_custom_call.1} parent=1 // pred_region
      %238 = dma.done [#allocation7], 16
    $region49: #{tpu_custom_call.1} parent=1 // pred_fallthru
      _
    %239 = sfence
    %240 = vsyncpa [#allocation5], 1
    %241 = vsyncpa [#allocation9], 1
    %242 = vsyncpa [#allocation6], 1
    %243 = vsyncpa [#allocation7], 1

</llo_original>
